<compile_context>
chip_gen: v7x
topology: tpu7x:2x2x1
jax: 0.10.0
libtpu: 0.0.40
codegen_flags: <defaults>
</compile_context>

<pallas_src>
import jax
import jax.numpy as jnp
from jax import lax
from jax.experimental import pallas as pl
from jax.experimental.pallas import tpu as pltpu


def _outputhead_kernel(patches_ref, wc_ref, w2_ref, mmatT_ref, bias_ref,
                       policy_ref, value_ref):
    # patches_ref: (Kpad, P)  im2col'ed input, P = N*H*W lane-dense.
    #                         Row K is all-ones (carries the folded BN bias).
    # wc_ref:      (Cm, Kpad) conv weight with BN scale folded into rows and
    #                         the folded BN bias in column K.
    # w2_ref:      (2, Cm)    row 0 = policy 1x1-conv weight, row 1 = value Linear weight
    # mmatT_ref:   (N, P)     block "spatial mean" matrix, 1/(H*W) entries, lane-dense
    # bias_ref:    (2,) SMEM  [policy bias, value bias]
    # policy_ref:  (1, P)     value_ref: (1, N)

    # 3x3 conv (padding pre-applied via im2col) + folded BN, as one MXU matmul.
    xT = jnp.dot(wc_ref[...], patches_ref[...],
                 preferred_element_type=jnp.float32)              # (Cm, P) f32

    # ReLU on the VPU.
    xT = jnp.maximum(xT, 0.0)

    # Both heads fused into one small matmul.
    heads = jnp.dot(w2_ref[...], xT,
                    preferred_element_type=jnp.float32)           # (2, P)

    # Policy head: per-pixel 1x1 conv, stored lane-dense (no in-kernel reshape).
    policy_ref[...] = heads[0:1, :] + bias_ref[0]

    # Value head: per-batch spatial mean, contracting over P against the
    # lane-dense (N, P) mean matrix, + bias.
    value_ref[...] = lax.dot_general(
        heads[1:2, :], mmatT_ref[...],
        dimension_numbers=(((1,), (1,)), ((), ())),
        preferred_element_type=jnp.float32) + bias_ref[1]         # (1, N)


def outputhead_forward(h_nchw, params, *, operand_dtype=jnp.bfloat16):
    """h_nchw: (N, Cin, H, W) float32 (PyTorch layout).

    operand_dtype: dtype of the big MXU operands (patches / conv weight).
    Returns (policy (N, H, W), value (N, 1)).
    """
    N, Cin, H, W = h_nchw.shape
    Cm = params["conv_w"].shape[0]
    eps = 1e-5
    P = N * H * W
    K = 9 * Cin
    # Reserve one extra K row for the folded BN bias, then round the K
    # dimension up to a multiple of 8 (sublanes).
    Kpad = ((K + 1 + 7) // 8) * 8

    # --- im2col, channel-major up front (no 5-D transpose afterwards) -------
    x_cnhw = jnp.transpose(h_nchw, (1, 0, 2, 3)).astype(jnp.float32)  # (Cin,N,H,W)
    xp = jnp.pad(x_cnhw, ((0, 0), (0, 0), (1, 1), (1, 1)))
    taps = [xp[:, :, dy:dy + H, dx:dx + W]
            for dy in range(3) for dx in range(3)]                # 9 x (Cin,N,H,W)
    patches = jnp.stack(taps, axis=0).reshape(K, P)               # (9*Cin, P)
    # Row K is all-ones: it multiplies the folded BN bias column of wc.
    patches = jnp.concatenate(
        [patches,
         jnp.ones((1, P), patches.dtype),
         jnp.zeros((Kpad - K - 1, P), patches.dtype)], axis=0)    # (Kpad, P)
    patches = patches.astype(operand_dtype)

    # --- conv weight with BN (eval-mode running stats) folded in ------------
    scale = params["bn_gamma"] / jnp.sqrt(params["bn_var"] + eps)     # (Cm,)
    bn_bias = params["bn_beta"] - params["bn_mean"] * scale           # (Cm,)
    # (Cm, Cin, 3, 3) -> (Cm, 9*Cin), tap-major (k = (ky*3+kx)*Cin + cin),
    # matching the patches ordering above.
    wc = jnp.transpose(params["conv_w"], (0, 2, 3, 1)).reshape(Cm, K)
    wc = wc * scale[:, None]                                          # fold BN scale
    wc = jnp.concatenate(
        [wc, bn_bias[:, None], jnp.zeros((Cm, Kpad - K - 1), wc.dtype)], axis=1)
    wc = wc.astype(operand_dtype)                                     # (Cm, Kpad)

    # Policy 1x1-conv weight and value Linear weight stacked into (2, Cm).
    w2 = jnp.concatenate([params["policy_w"].reshape(1, Cm),
                          params["value_w"].reshape(1, Cm)],
                         axis=0).astype(jnp.float32)                  # (2, Cm)

    # Lane-dense transposed spatial-mean matrix: (N, P), 1/(H*W) on each
    # batch's P-chunk.  (Assumes P is ordered batch-slowest, as built above.)
    mmatT = jnp.repeat(jnp.eye(N, dtype=jnp.float32), H * W, axis=1) / float(H * W)

    # Head biases as SMEM scalars.
    head_bias = jnp.stack([params["policy_b"][0],
                           params["value_b"][0]]).astype(jnp.float32)  # (2,)

    # Whole batch in one grid step (P = 512 here).  For large batches, tile
    # the grid over P: patches block (Kpad, 1024-2048), policy block (1, same),
    # keep wc/w2 index_maps constant in that axis so they stay resident, and
    # mark the axis "parallel" (v7x: 2 TensorCores, re-derive vmem_limit_bytes
    # against 64 MiB).
    policy_flat, value_flat = pl.pallas_call(
        _outputhead_kernel,
        out_shape=(
            jax.ShapeDtypeStruct((1, P), jnp.float32),
            jax.ShapeDtypeStruct((1, N), jnp.float32),
        ),
        grid_spec=pltpu.PrefetchScalarGridSpec(
            num_scalar_prefetch=0,
            grid=(1,),
            in_specs=[
                pl.BlockSpec((Kpad, P), lambda i: (0, 0)),
                pl.BlockSpec((Cm, Kpad), lambda i: (0, 0)),
                pl.BlockSpec((2, Cm), lambda i: (0, 0)),
                pl.BlockSpec((N, P), lambda i: (0, 0)),
                pl.BlockSpec(memory_space=pltpu.MemorySpace.SMEM),
            ],
            out_specs=[
                pl.BlockSpec((1, P), lambda i: (0, 0)),
                pl.BlockSpec((1, N), lambda i: (0, 0)),
            ],
        ),
        compiler_params=pltpu.CompilerParams(
            dimension_semantics=("arbitrary",)),
    )(patches, wc, w2, mmatT, head_bias)

    policy = policy_flat.reshape(N, H, W)
    value = value_flat.reshape(N, 1)
    return policy, value


def reference_forward(h_nchw, params):
    """Pure-JAX (XLA) reference matching the PyTorch module (eval-mode BN)."""
    eps = 1e-5
    y = lax.conv_general_dilated(
        h_nchw, params["conv_w"], window_strides=(1, 1),
        padding=((1, 1), (1, 1)),
        dimension_numbers=("NCHW", "OIHW", "NCHW"))
    scale = params["bn_gamma"] / jnp.sqrt(params["bn_var"] + eps)
    bias = params["bn_beta"] - params["bn_mean"] * scale
    y = y * scale[None, :, None, None] + bias[None, :, None, None]
    x = jnp.maximum(y, 0.0)
    value = jnp.mean(x, axis=(2, 3))                              # (N, Cm)
    value = value @ params["value_w"].T + params["value_b"]       # (N, 1)
    policy = lax.conv_general_dilated(
        x, params["policy_w"], window_strides=(1, 1), padding=((0, 0), (0, 0)),
        dimension_numbers=("NCHW", "OIHW", "NCHW"))
    policy = policy[:, 0] + params["policy_b"][0]                 # (N, H, W)
    return policy, value


def init_params(key, out_c, head_mid_c):
    ks = jax.random.split(key, 9)
    return {
        "conv_w":   0.1 * jax.random.normal(ks[0], (head_mid_c, out_c, 3, 3), jnp.float32),
        "bn_gamma": 1.0 + 0.1 * jax.random.normal(ks[1], (head_mid_c,), jnp.float32),
        "bn_beta":  0.1 * jax.random.normal(ks[2], (head_mid_c,), jnp.float32),
        "bn_mean":  0.1 * jax.random.normal(ks[3], (head_mid_c,), jnp.float32),
        "bn_var":   0.5 + jnp.abs(jax.random.normal(ks[4], (head_mid_c,), jnp.float32)),
        "value_w":  0.1 * jax.random.normal(ks[5], (1, head_mid_c), jnp.float32),
        "value_b":  0.1 * jax.random.normal(ks[6], (1,), jnp.float32),
        "policy_w": 0.1 * jax.random.normal(ks[7], (1, head_mid_c, 1, 1), jnp.float32),
        "policy_b": 0.1 * jax.random.normal(ks[8], (1,), jnp.float32),
    }


if __name__ == "__main__":
    N, out_c, head_mid_c, H, W = 2, 7, 32, 16, 16

    params = init_params(jax.random.PRNGKey(0), out_c, head_mid_c)
    h = jax.random.normal(jax.random.PRNGKey(1), (N, out_c, H, W), jnp.float32)

    policy_ref, value_ref = jax.block_until_ready(reference_forward(h, params))

    # f32 MXU-operand path (bit-tight tolerance).
    policy32, value32 = jax.block_until_ready(
        outputhead_forward(h, params, operand_dtype=jnp.float32))
    assert policy32.shape == (N, H, W), policy32.shape
    assert value32.shape == (N, 1), value32.shape
    assert jnp.allclose(policy32, policy_ref, atol=2e-4, rtol=2e-4), \
        float(jnp.max(jnp.abs(policy32 - policy_ref)))
    assert jnp.allclose(value32, value_ref, atol=2e-4, rtol=2e-4), \
        float(jnp.max(jnp.abs(value32 - value_ref)))

    # bf16 MXU-operand path (default; f32 accumulate) — relaxed tolerance.
    policy16, value16 = jax.block_until_ready(
        outputhead_forward(h, params, operand_dtype=jnp.bfloat16))
    assert policy16.shape == (N, H, W), policy16.shape
    assert value16.shape == (N, 1), value16.shape
    assert jnp.allclose(policy16, policy_ref, atol=2e-2, rtol=2e-2), \
        float(jnp.max(jnp.abs(policy16 - policy_ref)))
    assert jnp.allclose(value16, value_ref, atol=2e-2, rtol=2e-2), \
        float(jnp.max(jnp.abs(value16 - value_ref)))

    print("KERNEL_OK")
</pallas_src>

<mosaic_0001>
module attributes {stable_mosaic.version = 11 : i64} {
  func.func @_outputhead_kernel(%arg0: i32, %arg1: memref<64x512xf32, #tpu.memory_space<vmem>>, %arg2: memref<32x64xf32, #tpu.memory_space<vmem>>, %arg3: memref<2x32xf32, #tpu.memory_space<vmem>>, %arg4: memref<2x512xf32, #tpu.memory_space<vmem>>, %arg5: memref<2xf32, #tpu.memory_space<smem>>, %arg6: memref<1x512xf32, #tpu.memory_space<vmem>>, %arg7: memref<1x2xf32, #tpu.memory_space<vmem>>) attributes {dimension_semantics = [#tpu.dimension_semantics<arbitrary>], iteration_bounds = array<i64: 1>, scalar_prefetch = 0 : i64, scratch_operands = 0 : i64, tpu.core_type = #tpu.core_type<tc>, window_params = [{pipeline_mode = #tpu.pipeline_mode<synchronous>, transform_indices = @transform_0, window_bounds = array<i64: 64, 512>}, {pipeline_mode = #tpu.pipeline_mode<synchronous>, transform_indices = @transform_1, window_bounds = array<i64: 32, 64>}, {pipeline_mode = #tpu.pipeline_mode<synchronous>, transform_indices = @transform_2, window_bounds = array<i64: 2, 32>}, {pipeline_mode = #tpu.pipeline_mode<synchronous>, transform_indices = @transform_3, window_bounds = array<i64: 2, 512>}, {transform_indices = @transform_4, window_bounds = array<i64: 2>}, {pipeline_mode = #tpu.pipeline_mode<synchronous>, transform_indices = @transform_5, window_bounds = array<i64: 1, 512>}, {pipeline_mode = #tpu.pipeline_mode<synchronous>, transform_indices = @transform_6, window_bounds = array<i64: 1, 2>}]} {
    %c0 = arith.constant 0 : index
    %c0_0 = arith.constant 0 : index
    %0 = vector.load %arg2[%c0, %c0_0] : memref<32x64xf32, #tpu.memory_space<vmem>>, vector<32x64xf32>
    %c0_1 = arith.constant 0 : index
    %c0_2 = arith.constant 0 : index
    %1 = vector.load %arg1[%c0_1, %c0_2] : memref<64x512xf32, #tpu.memory_space<vmem>>, vector<64x512xf32>
    %cst = arith.constant dense<0.000000e+00> : vector<32x512xf32>
    %2 = tpu.matmul %0, %1, %cst {dimension_numbers = #tpu.dot_dimension_numbers<[1], [0], [0], [1], [0, 0, 1, 1], [], []>} : vector<32x64xf32>, vector<64x512xf32>, vector<32x512xf32> -> vector<32x512xf32>
    %cst_3 = arith.constant 0.000000e+00 : f32
    %3 = vector.broadcast %cst_3 : f32 to vector<32x512xf32>
    %4 = arith.maximumf %2, %3 : vector<32x512xf32>
    %c0_4 = arith.constant 0 : index
    %c0_5 = arith.constant 0 : index
    %5 = vector.load %arg3[%c0_4, %c0_5] : memref<2x32xf32, #tpu.memory_space<vmem>>, vector<2x32xf32>
    %cst_6 = arith.constant dense<0.000000e+00> : vector<2x512xf32>
    %6 = tpu.matmul %5, %4, %cst_6 {dimension_numbers = #tpu.dot_dimension_numbers<[1], [0], [0], [1], [0, 0, 1, 1], [], []>} : vector<2x32xf32>, vector<32x512xf32>, vector<2x512xf32> -> vector<2x512xf32>
    %7 = vector.extract_strided_slice %6 {offsets = [0, 0], sizes = [1, 512], strides = [1, 1]} : vector<2x512xf32> to vector<1x512xf32>
    %c0_7 = arith.constant 0 : index
    %8 = memref.load %arg5[%c0_7] : memref<2xf32, #tpu.memory_space<smem>>
    %9 = vector.broadcast %8 : f32 to vector<1x512xf32>
    %10 = arith.addf %7, %9 : vector<1x512xf32>
    %c0_8 = arith.constant 0 : index
    %c0_9 = arith.constant 0 : index
    %11 = vector.load %arg6[%c0_8, %c0_9] : memref<1x512xf32, #tpu.memory_space<vmem>>, vector<1x512xf32>
    tpu.vector_store %arg6[%c0_8, %c0_9], %10 {strides = array<i32>} : memref<1x512xf32, #tpu.memory_space<vmem>>, vector<1x512xf32>,
    %12 = vector.extract_strided_slice %6 {offsets = [1, 0], sizes = [1, 512], strides = [1, 1]} : vector<2x512xf32> to vector<1x512xf32>
    %c0_10 = arith.constant 0 : index
    %c0_11 = arith.constant 0 : index
    %13 = vector.load %arg4[%c0_10, %c0_11] : memref<2x512xf32, #tpu.memory_space<vmem>>, vector<2x512xf32>
    %cst_12 = arith.constant dense<0.000000e+00> : vector<1x2xf32>
    %14 = tpu.matmul %12, %13, %cst_12 {dimension_numbers = #tpu.dot_dimension_numbers<[1], [1], [0], [0], [0, 0, 1, 0], [], []>} : vector<1x512xf32>, vector<2x512xf32>, vector<1x2xf32> -> vector<1x2xf32>
    %c1 = arith.constant 1 : index
    %15 = memref.load %arg5[%c1] : memref<2xf32, #tpu.memory_space<smem>>
    %16 = vector.broadcast %15 : f32 to vector<1x2xf32>
    %17 = arith.addf %14, %16 : vector<1x2xf32>
    %c0_13 = arith.constant 0 : index
    %c0_14 = arith.constant 0 : index
    %18 = vector.load %arg7[%c0_13, %c0_14] : memref<1x2xf32, #tpu.memory_space<vmem>>, vector<1x2xf32>
    tpu.vector_store %arg7[%c0_13, %c0_14], %17 {strides = array<i32>} : memref<1x2xf32, #tpu.memory_space<vmem>>, vector<1x2xf32>,
    return
  }
  func.func @transform_0(%arg0: i32) -> (i32, i32) {
    %c0_i32 = arith.constant 0 : i32
    %c0_i32_0 = arith.constant 0 : i32
    %c0_i32_1 = arith.constant 0 : i32
    return %c0_i32, %c0_i32_0 : i32, i32
  }
  func.func @transform_1(%arg0: i32) -> (i32, i32) {
    %c0_i32 = arith.constant 0 : i32
    %c0_i32_0 = arith.constant 0 : i32
    %c0_i32_1 = arith.constant 0 : i32
    return %c0_i32, %c0_i32_0 : i32, i32
  }
  func.func @transform_2(%arg0: i32) -> (i32, i32) {
    %c0_i32 = arith.constant 0 : i32
    %c0_i32_0 = arith.constant 0 : i32
    %c0_i32_1 = arith.constant 0 : i32
    return %c0_i32, %c0_i32_0 : i32, i32
  }
  func.func @transform_3(%arg0: i32) -> (i32, i32) {
    %c0_i32 = arith.constant 0 : i32
    %c0_i32_0 = arith.constant 0 : i32
    %c0_i32_1 = arith.constant 0 : i32
    return %c0_i32, %c0_i32_0 : i32, i32
  }
  func.func @transform_4(%arg0: i32) -> i32 {
    %c0_i32 = arith.constant 0 : i32
    %c0_i32_0 = arith.constant 0 : i32
    return %c0_i32 : i32
  }
  func.func @transform_5(%arg0: i32) -> (i32, i32) {
    %c0_i32 = arith.constant 0 : i32
    %c0_i32_0 = arith.constant 0 : i32
    %c0_i32_1 = arith.constant 0 : i32
    return %c0_i32, %c0_i32_0 : i32, i32
  }
  func.func @transform_6(%arg0: i32) -> (i32, i32) {
    %c0_i32 = arith.constant 0 : i32
    %c0_i32_0 = arith.constant 0 : i32
    %c0_i32_1 = arith.constant 0 : i32
    return %c0_i32, %c0_i32_0 : i32, i32
  }
}

</mosaic_0001>

<llo_original>
// kernel: tpu_custom_call.1
$region0: #{tpu_custom_call.1}
  #allocation0 [shape = 'u32[]', space=smem, size = 0x4, offset = 0x4, fixed_abs, tag = 'smem constant byte address 0x4 - core index']
  #allocation1 [shape = 'u32[144,128]{1,0:T(1,128)}', space=vmem, size = 0x12000, scoped, tag = 'internal scratch']
  %s0 = inlined_call_operand.hbm [shape: f32[64,512], index: 0, kind: input, shape index: {}]
  %s1 = inlined_call_operand.hbm [shape: f32[32,64], index: 1, kind: input, shape index: {}]
  %s2 = inlined_call_operand.vmem [shape: f32[2,32], index: 2, kind: input, shape index: {}]
  %s3 = inlined_call_operand.vmem [shape: f32[2,512], index: 3, kind: input, shape index: {}]
  %s4 = inlined_call_operand.vmem [shape: f32[2], index: 4, kind: input, shape index: {}]
  %s5 = inlined_call_operand.hbm [shape: f32[1,512], index: 5, kind: output, shape index: {0}]
  %s6 = inlined_call_operand.hbm [shape: f32[1,2], index: 6, kind: output, shape index: {1}]
  %7 = xla_tuple %s5, %s6
  %s8 = sld [smem:[#allocation0]]
  $region50: #{tpu_custom_call.1} parent=0
    _
  %s10 = ssub.s32 1, %s8
  %s11 = scalar_select 0, %s10, %s8
  $region1: #{tpu_custom_call.1} parent=0
    #allocation2 [shape = 'u8[131072]{0}', space=vmem, size = 0x20000, scoped, tag = 'input window, operand 0, single buffered']
    #allocation3 [shape = 's32[1]{0}', space=sflag, size = 0x4, scoped, tag = 'scoped memory for tpu_custom_call.1']
    #allocation4 [shape = 's32[1]{0}', space=sflag, size = 0x4, scoped, tag = 'scoped memory for tpu_custom_call.1']
    #allocation5 [shape = 's32[1]{0}', space=sflag, size = 0x4, scoped, tag = 'scoped memory for tpu_custom_call.1']
    #allocation6 [shape = 'u8[16384]{0}', space=vmem, size = 0x4000, scoped, tag = 'input window, operand 1, single buffered']
    #allocation7 [shape = 's32[1]{0}', space=sflag, size = 0x4, scoped, tag = 'scoped memory for tpu_custom_call.1']
    #allocation8 [shape = 'u8[512]{0}', space=smem, size = 0x200, scoped, tag = 'input window, operand 4, single buffered']
    #allocation9 [shape = 'u8[2048]{0}', space=vmem, size = 0x800, scoped, tag = 'output window, operand 0, single buffered']
    #allocation10 [shape = 'u8[512]{0}', space=vmem, size = 0x400, scoped, tag = 'output window, operand 1, single buffered']
    #allocation11 [shape = 's32[1]{0}', space=sflag, size = 0x4, scoped, tag = 'scoped memory for tpu_custom_call.1']
    %12 = vsyncpa [#allocation3], 0
    %13 = vsyncpa [#allocation7], 0
    %14 = vsyncpa [#allocation5], 0
    %15 = vsyncpa [#allocation4], 0
    %16 = vsyncpa [#allocation11], 0
    // Predicated region
    $region2: #{tpu_custom_call.1} parent=1 // pred_check
      _
    $region3: #{tpu_custom_call.1} parent=1 // pred_check_branch
      %18 = sbr.rel (0) target = $region5
    $region4: #{tpu_custom_call.1} parent=1 // pred_region
      %s20 = ssub.s32 4096, 4096
      %21 = vsyncadd [#allocation3], %s20
      %s22 = sshll.u32 [#allocation2], 4
      %s23 = int_to_ptr.vmem [resolvable:$true] %s22
      %28 = dma.hbm_to_vmem [thread:$0]  %s0, 4096, %s23, [#allocation3], 512, 512, 32
    $region5: #{tpu_custom_call.1} parent=1 // pred_fallthru
      _
    // Predicated region
    $region6: #{tpu_custom_call.1} parent=1 // pred_check
      _
    $region7: #{tpu_custom_call.1} parent=1 // pred_check_branch
      %30 = sbr.rel (0) target = $region9
    $region8: #{tpu_custom_call.1} parent=1 // pred_region
      %s32 = ssub.s32 512, 512
      %33 = vsyncadd [#allocation7], %s32
      %s34 = sshll.u32 [#allocation6], 4
      %s35 = int_to_ptr.vmem [resolvable:$true] %s34
      %40 = dma.hbm_to_vmem [thread:$0]  %s1, 512, %s35, [#allocation7], 128, 128, 8
    $region9: #{tpu_custom_call.1} parent=1 // pred_fallthru
      _
    // Predicated region
    $region10: #{tpu_custom_call.1} parent=1 // pred_check
      _
    $region11: #{tpu_custom_call.1} parent=1 // pred_check_branch
      %42 = sbr.rel (0) target = $region13
    $region12: #{tpu_custom_call.1} parent=1 // pred_region
      _
    $region13: #{tpu_custom_call.1} parent=1 // pred_fallthru
      _
    // Predicated region
    $region14: #{tpu_custom_call.1} parent=1 // pred_check
      _
    $region15: #{tpu_custom_call.1} parent=1 // pred_check_branch
      %44 = sbr.rel (0) target = $region17
    $region16: #{tpu_custom_call.1} parent=1 // pred_region
      _
    $region17: #{tpu_custom_call.1} parent=1 // pred_fallthru
      _
    // Predicated region
    $region18: #{tpu_custom_call.1} parent=1 // pred_check
      _
    $region19: #{tpu_custom_call.1} parent=1 // pred_check_branch
      %46 = sbr.rel (0) target = $region21
    $region20: #{tpu_custom_call.1} parent=1 // pred_region
      %s48 = ssub.s32 16, 16
      %49 = vsyncadd [#allocation5], %s48
      %s51 = sshll.u32 %s4, 4
      %s52 = int_to_ptr.vmem [resolvable:$true] %s51
      %54 = dma.vmem_to_smem %s52, 16, [#allocation8], [#allocation5]
    $region21: #{tpu_custom_call.1} parent=1 // pred_fallthru
      _
    // Predicated region
    $region22: #{tpu_custom_call.1} parent=1 // pred_check
      _
    $region23: #{tpu_custom_call.1} parent=1 // pred_check_branch
      %56 = sbr.rel (0) target = $region25
    $region24: #{tpu_custom_call.1} parent=1 // pred_region
      %57 = dma.done [#allocation3], 4096
    $region25: #{tpu_custom_call.1} parent=1 // pred_fallthru
      _
    // Predicated region
    $region26: #{tpu_custom_call.1} parent=1 // pred_check
      _
    $region27: #{tpu_custom_call.1} parent=1 // pred_check_branch
      %59 = sbr.rel (0) target = $region29
    $region28: #{tpu_custom_call.1} parent=1 // pred_region
      %60 = dma.done [#allocation7], 512
    $region29: #{tpu_custom_call.1} parent=1 // pred_fallthru
      _
    // Predicated region
    $region30: #{tpu_custom_call.1} parent=1 // pred_check
      _
    $region31: #{tpu_custom_call.1} parent=1 // pred_check_branch
      %62 = sbr.rel (0) target = $region33
    $region32: #{tpu_custom_call.1} parent=1 // pred_region
      %63 = dma.done [#allocation5], 16
    $region33: #{tpu_custom_call.1} parent=1 // pred_fallthru
      _
    %64 = sfence
    %v65 = vld [vmem:[#allocation6] sm:$0xff]
    %v66 = vld [vmem:[#allocation6 + $0x8] sm:$0xff]
    %v67 = vld [vmem:[#allocation6 + $0x10] sm:$0xff]
    %v68 = vld [vmem:[#allocation6 + $0x18] sm:$0xff]
    %v69 = vld [vmem:[#allocation2] sm:$0xff]
    %v70 = vld [vmem:[#allocation2 + $0x8] sm:$0xff]
    %v71 = vld [vmem:[#allocation2 + $0x10] sm:$0xff]
    %v72 = vld [vmem:[#allocation2 + $0x18] sm:$0xff]
    %v73 = vld [vmem:[#allocation2 + $0x20] sm:$0xff]
    %v74 = vld [vmem:[#allocation2 + $0x28] sm:$0xff]
    %v75 = vld [vmem:[#allocation2 + $0x30] sm:$0xff]
    %v76 = vld [vmem:[#allocation2 + $0x38] sm:$0xff]
    %v77 = vld [vmem:[#allocation2 + $0x40] sm:$0xff]
    %v78 = vld [vmem:[#allocation2 + $0x48] sm:$0xff]
    %v79 = vld [vmem:[#allocation2 + $0x50] sm:$0xff]
    %v80 = vld [vmem:[#allocation2 + $0x58] sm:$0xff]
    %v81 = vld [vmem:[#allocation2 + $0x60] sm:$0xff]
    %v82 = vld [vmem:[#allocation2 + $0x68] sm:$0xff]
    %v83 = vld [vmem:[#allocation2 + $0x70] sm:$0xff]
    %v84 = vld [vmem:[#allocation2 + $0x78] sm:$0xff]
    %v85 = vld [vmem:[#allocation2 + $0x80] sm:$0xff]
    %v86 = vld [vmem:[#allocation2 + $0x88] sm:$0xff]
    %v87 = vld [vmem:[#allocation2 + $0x90] sm:$0xff]
    %v88 = vld [vmem:[#allocation2 + $0x98] sm:$0xff]
    %v89 = vld [vmem:[#allocation2 + $0xa0] sm:$0xff]
    %v90 = vld [vmem:[#allocation2 + $0xa8] sm:$0xff]
    %v91 = vld [vmem:[#allocation2 + $0xb0] sm:$0xff]
    %v92 = vld [vmem:[#allocation2 + $0xb8] sm:$0xff]
    %v93 = vld [vmem:[#allocation2 + $0xc0] sm:$0xff]
    %v94 = vld [vmem:[#allocation2 + $0xc8] sm:$0xff]
    %v95 = vld [vmem:[#allocation2 + $0xd0] sm:$0xff]
    %v96 = vld [vmem:[#allocation2 + $0xd8] sm:$0xff]
    %v97 = vld [vmem:[#allocation2 + $0xe0] sm:$0xff]
    %v98 = vld [vmem:[#allocation2 + $0xe8] sm:$0xff]
    %v99 = vld [vmem:[#allocation2 + $0xf0] sm:$0xff]
    %v100 = vld [vmem:[#allocation2 + $0xf8] sm:$0xff]
    %vm101 = vcmask 523264
    %v103 = vsel %vm101, %v65, 0
    %v106 = vsel %vm101, %v66, 0
    %v109 = vsel %vm101, %v67, 0
    %v112 = vsel %vm101, %v68, 0
    %114 = vmatprep.subr.mxu0 %v70
    %115 = vmatpush1.msra.mxu0 %v69
    %116 = vmatprep.subr.mxu0 %v74
    %117 = vmatpush1.msra.mxu0 %v73
    %118 = vmatprep.subr.mxu0 %v78
    %119 = vmatpush1.msra.mxu0 %v77
    %120 = vmatprep.subr.mxu0 %v82
    %121 = vmatpush1.msra.mxu0 %v81
    %122 = vmatprep.subr.mxu0 %v86
    %123 = vmatpush1.msra.mxu0 %v85
    %124 = vmatprep.subr.mxu0 %v90
    %125 = vmatpush1.msra.mxu0 %v89
    %126 = vmatprep.subr.mxu0 %v94
    %127 = vmatpush1.msra.mxu0 %v93
    %128 = vmatprep.subr.mxu0 %v98
    %129 = vmatpush1.msra.mxu0 %v97
    %130 = vmatprep.subr.mxu0 0.0
    %131 = vmatpush1.msra.mxu0 0.0
    %132 = vmatprep.subr.mxu0 0.0
    %133 = vmatpush1.msra.mxu0 0.0
    %134 = vmatprep.subr.mxu0 0.0
    %135 = vmatpush1.msra.mxu0 0.0
    %136 = vmatprep.subr.mxu0 0.0
    %137 = vmatpush1.msra.mxu0 0.0
    %138 = vmatprep.subr.mxu0 0.0
    %139 = vmatpush1.msra.mxu0 0.0
    %140 = vmatprep.subr.mxu0 0.0
    %141 = vmatpush1.msra.mxu0 0.0
    %142 = vmatprep.subr.mxu0 0.0
    %143 = vmatpush1.msra.mxu0 0.0
    %144 = vmatprep.subr.mxu0 0.0
    %145 = vmatpush1.msra.mxu0 0.0
    %146 = vmatprep.subr.mxu0 0.0
    %147 = vmatpush1.msra.mxu0 0.0
    %148 = vmatprep.subr.mxu0 0.0
    %149 = vmatpush1.msra.mxu0 0.0
    %150 = vmatprep.subr.mxu0 0.0
    %151 = vmatpush1.msra.mxu0 0.0
    %152 = vmatprep.subr.mxu0 0.0
    %153 = vmatpush1.msra.mxu0 0.0
    %154 = vmatprep.subr.mxu0 0.0
    %155 = vmatpush1.msra.mxu0 0.0
    %156 = vmatprep.subr.mxu0 0.0
    %157 = vmatpush1.msra.mxu0 0.0
    %158 = vmatprep.subr.mxu0 0.0
    %159 = vmatpush1.msra.mxu0 0.0
    %160 = vmatprep.subr.mxu0 0.0
    %161 = vmatpush1.msra.mxu0 0.0
    %162 = vmatprep.subr.mxu0 0.0
    %163 = vmatpush1.msra.mxu0 0.0
    %164 = vmatprep.subr.mxu0 0.0
    %165 = vmatpush1.msra.mxu0 0.0
    %166 = vmatprep.subr.mxu0 0.0
    %167 = vmatpush1.msra.mxu0 0.0
    %168 = vmatprep.subr.mxu0 0.0
    %169 = vmatpush1.msra.mxu0 0.0
    %170 = vmatprep.subr.mxu0 0.0
    %171 = vmatpush1.msra.mxu0 0.0
    %172 = vmatprep.subr.mxu0 0.0
    %173 = vmatpush1.msra.mxu0 0.0
    %174 = vmatprep.subr.mxu0 0.0
    %175 = vmatpush1.msra.mxu0 0.0
    %176 = vmatprep.subr.mxu0 0.0
    %177 = vmatpush1.msra.mxu0 0.0
    %178 = vmatprep.mubr.f32.mxu0 0.0
    %179 = vmatmul.mubr.f32.gmra.mrb[0].mxu0 %v103
    %v180 = vpop.f32.mrb[0].mxu0
    %v181 = vadd.f32 0.0, %v180
    %v182 = vpop.f32.mrb[0].mxu0
    %v183 = vadd.f32 0.0, %v182
    %184 = vmatprep.mubr.f32.mxu0 0.0
    %185 = vmatmul.mubr.f32.gmra.mrb[0].mxu0 %v106
    %v186 = vpop.f32.mrb[0].mxu0
    %v187 = vadd.f32 0.0, %v186
    %v188 = vpop.f32.mrb[0].mxu0
    %v189 = vadd.f32 0.0, %v188
    %190 = vmatprep.mubr.f32.mxu0 0.0
    %191 = vmatmul.mubr.f32.gmra.mrb[0].mxu0 %v109
    %v192 = vpop.f32.mrb[0].mxu0
    %v193 = vadd.f32 0.0, %v192
    %v194 = vpop.f32.mrb[0].mxu0
    %v195 = vadd.f32 0.0, %v194
    %196 = vmatprep.mubr.f32.mxu0 0.0
    %197 = vmatmul.mubr.f32.gmra.mrb[0].mxu0 %v112
    %v198 = vpop.f32.mrb[0].mxu0
    %v199 = vadd.f32 0.0, %v198
    %v200 = vpop.f32.mrb[0].mxu0
    %v201 = vadd.f32 0.0, %v200
    %202 = vdwg.mxu0
    %203 = vmatprep.subr.mxu0 %v72
    %204 = vmatpush1.msra.mxu0 %v71
    %205 = vmatprep.subr.mxu0 %v76
    %206 = vmatpush1.msra.mxu0 %v75
    %207 = vmatprep.subr.mxu0 %v80
    %208 = vmatpush1.msra.mxu0 %v79
    %209 = vmatprep.subr.mxu0 %v84
    %210 = vmatpush1.msra.mxu0 %v83
    %211 = vmatprep.subr.mxu0 %v88
    %212 = vmatpush1.msra.mxu0 %v87
    %213 = vmatprep.subr.mxu0 %v92
    %214 = vmatpush1.msra.mxu0 %v91
    %215 = vmatprep.subr.mxu0 %v96
    %216 = vmatpush1.msra.mxu0 %v95
    %217 = vmatprep.subr.mxu0 %v100
    %218 = vmatpush1.msra.mxu0 %v99
    %219 = vmatprep.subr.mxu0 0.0
    %220 = vmatpush1.msra.mxu0 0.0
    %221 = vmatprep.subr.mxu0 0.0
    %222 = vmatpush1.msra.mxu0 0.0
    %223 = vmatprep.subr.mxu0 0.0
    %224 = vmatpush1.msra.mxu0 0.0
    %225 = vmatprep.subr.mxu0 0.0
    %226 = vmatpush1.msra.mxu0 0.0
    %227 = vmatprep.subr.mxu0 0.0
    %228 = vmatpush1.msra.mxu0 0.0
    %229 = vmatprep.subr.mxu0 0.0
    %230 = vmatpush1.msra.mxu0 0.0
    %231 = vmatprep.subr.mxu0 0.0
    %232 = vmatpush1.msra.mxu0 0.0
    %233 = vmatprep.subr.mxu0 0.0
    %234 = vmatpush1.msra.mxu0 0.0
    %235 = vmatprep.subr.mxu0 0.0
    %236 = vmatpush1.msra.mxu0 0.0
    %237 = vmatprep.subr.mxu0 0.0
    %238 = vmatpush1.msra.mxu0 0.0
    %239 = vmatprep.subr.mxu0 0.0
    %240 = vmatpush1.msra.mxu0 0.0
    %241 = vmatprep.subr.mxu0 0.0
    %242 = vmatpush1.msra.mxu0 0.0
    %243 = vmatprep.subr.mxu0 0.0
    %244 = vmatpush1.msra.mxu0 0.0
    %245 = vmatprep.subr.mxu0 0.0
    %246 = vmatpush1.msra.mxu0 0.0
    %247 = vmatprep.subr.mxu0 0.0
    %248 = vmatpush1.msra.mxu0 0.0
    %249 = vmatprep.subr.mxu0 0.0
    %250 = vmatpush1.msra.mxu0 0.0
    %251 = vmatprep.subr.mxu0 0.0
    %252 = vmatpush1.msra.mxu0 0.0
    %253 = vmatprep.subr.mxu0 0.0
    %254 = vmatpush1.msra.mxu0 0.0
    %255 = vmatprep.subr.mxu0 0.0
    %256 = vmatpush1.msra.mxu0 0.0
    %257 = vmatprep.subr.mxu0 0.0
    %258 = vmatpush1.msra.mxu0 0.0
    %259 = vmatprep.subr.mxu0 0.0
    %260 = vmatpush1.msra.mxu0 0.0
    %261 = vmatprep.subr.mxu0 0.0
    %262 = vmatpush1.msra.mxu0 0.0
    %263 = vmatprep.subr.mxu0 0.0
    %264 = vmatpush1.msra.mxu0 0.0
    %265 = vmatprep.subr.mxu0 0.0
    %266 = vmatpush1.msra.mxu0 0.0
    %267 = vmatprep.mubr.f32.mxu0 0.0
    %268 = vmatmul.mubr.f32.gmra.mrb[0].mxu0 %v103
    %v269 = vpop.f32.mrb[0].mxu0
    %v270 = vadd.f32 0.0, %v269
    %v271 = vpop.f32.mrb[0].mxu0
    %v272 = vadd.f32 0.0, %v271
    %273 = vmatprep.mubr.f32.mxu0 0.0
    %274 = vmatmul.mubr.f32.gmra.mrb[0].mxu0 %v106
    %v275 = vpop.f32.mrb[0].mxu0
    %v276 = vadd.f32 0.0, %v275
    %v277 = vpop.f32.mrb[0].mxu0
    %v278 = vadd.f32 0.0, %v277
    %279 = vmatprep.mubr.f32.mxu0 0.0
    %280 = vmatmul.mubr.f32.gmra.mrb[0].mxu0 %v109
    %v281 = vpop.f32.mrb[0].mxu0
    %v282 = vadd.f32 0.0, %v281
    %v283 = vpop.f32.mrb[0].mxu0
    %v284 = vadd.f32 0.0, %v283
    %285 = vmatprep.mubr.f32.mxu0 0.0
    %286 = vmatmul.mubr.f32.gmra.mrb[0].mxu0 %v112
    %v287 = vpop.f32.mrb[0].mxu0
    %v288 = vadd.f32 0.0, %v287
    %v289 = vpop.f32.mrb[0].mxu0
    %v290 = vadd.f32 0.0, %v289
    %291 = vdwg.mxu0
    %v292 = vmax.f32 %v181, 0.0
    %v293 = vmax.f32 %v183, 0.0
    %v294 = vmax.f32 %v270, 0.0
    %v295 = vmax.f32 %v272, 0.0
    %v296 = vmax.f32 %v187, 0.0
    %v297 = vmax.f32 %v189, 0.0
    %v298 = vmax.f32 %v276, 0.0
    %v299 = vmax.f32 %v278, 0.0
    %v300 = vmax.f32 %v193, 0.0
    %v301 = vmax.f32 %v195, 0.0
    %v302 = vmax.f32 %v282, 0.0
    %v303 = vmax.f32 %v284, 0.0
    %v304 = vmax.f32 %v199, 0.0
    %v305 = vmax.f32 %v201, 0.0
    %v306 = vmax.f32 %v288, 0.0
    %v307 = vmax.f32 %v290, 0.0
    %v308 = vld [vmem:[%s2] sm:$0x3]
    %vm309 = vcmask 261120
    %v311 = vsel %vm309, %v308, 0
    %313 = vmatprep.subr.mxu0 %v293
    %314 = vmatpush1.msra.mxu0 %v292
    %315 = vmatprep.subr.mxu0 %v297
    %316 = vmatpush1.msra.mxu0 %v296
    %317 = vmatprep.subr.mxu0 %v301
    %318 = vmatpush1.msra.mxu0 %v300
    %319 = vmatprep.subr.mxu0 %v305
    %320 = vmatpush1.msra.mxu0 %v304
    %321 = vmatprep.subr.mxu0 0.0
    %322 = vmatpush1.msra.mxu0 0.0
    %323 = vmatprep.subr.mxu0 0.0
    %324 = vmatpush1.msra.mxu0 0.0
    %325 = vmatprep.subr.mxu0 0.0
    %326 = vmatpush1.msra.mxu0 0.0
    %327 = vmatprep.subr.mxu0 0.0
    %328 = vmatpush1.msra.mxu0 0.0
    %329 = vmatprep.subr.mxu0 0.0
    %330 = vmatpush1.msra.mxu0 0.0
    %331 = vmatprep.subr.mxu0 0.0
    %332 = vmatpush1.msra.mxu0 0.0
    %333 = vmatprep.subr.mxu0 0.0
    %334 = vmatpush1.msra.mxu0 0.0
    %335 = vmatprep.subr.mxu0 0.0
    %336 = vmatpush1.msra.mxu0 0.0
    %337 = vmatprep.subr.mxu0 0.0
    %338 = vmatpush1.msra.mxu0 0.0
    %339 = vmatprep.subr.mxu0 0.0
    %340 = vmatpush1.msra.mxu0 0.0
    %341 = vmatprep.subr.mxu0 0.0
    %342 = vmatpush1.msra.mxu0 0.0
    %343 = vmatprep.subr.mxu0 0.0
    %344 = vmatpush1.msra.mxu0 0.0
    %345 = vmatprep.subr.mxu0 0.0
    %346 = vmatpush1.msra.mxu0 0.0
    %347 = vmatprep.subr.mxu0 0.0
    %348 = vmatpush1.msra.mxu0 0.0
    %349 = vmatprep.subr.mxu0 0.0
    %350 = vmatpush1.msra.mxu0 0.0
    %351 = vmatprep.subr.mxu0 0.0
    %352 = vmatpush1.msra.mxu0 0.0
    %353 = vmatprep.subr.mxu0 0.0
    %354 = vmatpush1.msra.mxu0 0.0
    %355 = vmatprep.subr.mxu0 0.0
    %356 = vmatpush1.msra.mxu0 0.0
    %357 = vmatprep.subr.mxu0 0.0
    %358 = vmatpush1.msra.mxu0 0.0
    %359 = vmatprep.subr.mxu0 0.0
    %360 = vmatpush1.msra.mxu0 0.0
    %361 = vmatprep.subr.mxu0 0.0
    %362 = vmatpush1.msra.mxu0 0.0
    %363 = vmatprep.subr.mxu0 0.0
    %364 = vmatpush1.msra.mxu0 0.0
    %365 = vmatprep.subr.mxu0 0.0
    %366 = vmatpush1.msra.mxu0 0.0
    %367 = vmatprep.subr.mxu0 0.0
    %368 = vmatpush1.msra.mxu0 0.0
    %369 = vmatprep.subr.mxu0 0.0
    %370 = vmatpush1.msra.mxu0 0.0
    %371 = vmatprep.subr.mxu0 0.0
    %372 = vmatpush1.msra.mxu0 0.0
    %373 = vmatprep.subr.mxu0 0.0
    %374 = vmatpush1.msra.mxu0 0.0
    %375 = vmatprep.subr.mxu0 0.0
    %376 = vmatpush1.msra.mxu0 0.0
    %377 = vmatprep.mubr.f32.mxu0 0.0
    %378 = vmatmul.mubr.f32.gmra.mrb[0].mxu0 %v311
    %v379 = vpop.f32.mrb[0].mxu0
    %v380 = vadd.f32 0.0, %v379
    %v381 = vpop.f32.mrb[0].mxu0
    %v382 = vadd.f32 0.0, %v381
    %383 = vdwg.mxu0
    %384 = vmatprep.subr.mxu0 %v295
    %385 = vmatpush1.msra.mxu0 %v294
    %386 = vmatprep.subr.mxu0 %v299
    %387 = vmatpush1.msra.mxu0 %v298
    %388 = vmatprep.subr.mxu0 %v303
    %389 = vmatpush1.msra.mxu0 %v302
    %390 = vmatprep.subr.mxu0 %v307
    %391 = vmatpush1.msra.mxu0 %v306
    %392 = vmatprep.subr.mxu0 0.0
    %393 = vmatpush1.msra.mxu0 0.0
    %394 = vmatprep.subr.mxu0 0.0
    %395 = vmatpush1.msra.mxu0 0.0
    %396 = vmatprep.subr.mxu0 0.0
    %397 = vmatpush1.msra.mxu0 0.0
    %398 = vmatprep.subr.mxu0 0.0
    %399 = vmatpush1.msra.mxu0 0.0
    %400 = vmatprep.subr.mxu0 0.0
    %401 = vmatpush1.msra.mxu0 0.0
    %402 = vmatprep.subr.mxu0 0.0
    %403 = vmatpush1.msra.mxu0 0.0
    %404 = vmatprep.subr.mxu0 0.0
    %405 = vmatpush1.msra.mxu0 0.0
    %406 = vmatprep.subr.mxu0 0.0
    %407 = vmatpush1.msra.mxu0 0.0
    %408 = vmatprep.subr.mxu0 0.0
    %409 = vmatpush1.msra.mxu0 0.0
    %410 = vmatprep.subr.mxu0 0.0
    %411 = vmatpush1.msra.mxu0 0.0
    %412 = vmatprep.subr.mxu0 0.0
    %413 = vmatpush1.msra.mxu0 0.0
    %414 = vmatprep.subr.mxu0 0.0
    %415 = vmatpush1.msra.mxu0 0.0
    %416 = vmatprep.subr.mxu0 0.0
    %417 = vmatpush1.msra.mxu0 0.0
    %418 = vmatprep.subr.mxu0 0.0
    %419 = vmatpush1.msra.mxu0 0.0
    %420 = vmatprep.subr.mxu0 0.0
    %421 = vmatpush1.msra.mxu0 0.0
    %422 = vmatprep.subr.mxu0 0.0
    %423 = vmatpush1.msra.mxu0 0.0
    %424 = vmatprep.subr.mxu0 0.0
    %425 = vmatpush1.msra.mxu0 0.0
    %426 = vmatprep.subr.mxu0 0.0
    %427 = vmatpush1.msra.mxu0 0.0
    %428 = vmatprep.subr.mxu0 0.0
    %429 = vmatpush1.msra.mxu0 0.0
    %430 = vmatprep.subr.mxu0 0.0
    %431 = vmatpush1.msra.mxu0 0.0
    %432 = vmatprep.subr.mxu0 0.0
    %433 = vmatpush1.msra.mxu0 0.0
    %434 = vmatprep.subr.mxu0 0.0
    %435 = vmatpush1.msra.mxu0 0.0
    %436 = vmatprep.subr.mxu0 0.0
    %437 = vmatpush1.msra.mxu0 0.0
    %438 = vmatprep.subr.mxu0 0.0
    %439 = vmatpush1.msra.mxu0 0.0
    %440 = vmatprep.subr.mxu0 0.0
    %441 = vmatpush1.msra.mxu0 0.0
    %442 = vmatprep.subr.mxu0 0.0
    %443 = vmatpush1.msra.mxu0 0.0
    %444 = vmatprep.subr.mxu0 0.0
    %445 = vmatpush1.msra.mxu0 0.0
    %446 = vmatprep.subr.mxu0 0.0
    %447 = vmatpush1.msra.mxu0 0.0
    %448 = vmatprep.mubr.f32.mxu0 0.0
    %449 = vmatmul.mubr.f32.gmra.mrb[0].mxu0 %v311
    %v450 = vpop.f32.mrb[0].mxu0
    %v451 = vadd.f32 0.0, %v450
    %v452 = vpop.f32.mrb[0].mxu0
    %v453 = vadd.f32 0.0, %v452
    %454 = vdwg.mxu0
    %s455 = sld [smem:[#allocation8]]
    %v456 = vstv %s455
    %v457 = vadd.f32 %v380, %v456
    %v458 = vadd.f32 %v382, %v456
    %v459 = vadd.f32 %v451, %v456
    %v460 = vadd.f32 %v453, %v456
    %v465 = vcombine.low %v457, %v458
    %v466 = vcombine.low %v459, %v460
    %v468 = vunpack.c.l.s4 1966171168
    %v469 = vunpack.c.0.s8 %v468
    %v470 = vlaneseq
    %v471 = vshrl.u32 %v470, 7
    %v472 = vsub.s32 %v469, %v471
    %v473 = vrot.slane %v465, %v472
    %v475 = vunpack.c.l.s4 1966171168
    %v476 = vunpack.c.0.s8 %v475
    %v477 = vlaneseq
    %v478 = vshrl.u32 %v477, 7
    %v479 = vsub.s32 %v476, %v478
    %v480 = vrot.slane %v466, %v479
    %v481 = vcombine.low %v473, %v480
    %v483 = vunpack.c.l.s4 1966171168
    %v484 = vunpack.c.0.s8 %v483
    %v485 = vlaneseq
    %v486 = vshrl.u32 %v485, 7
    %v487 = vsub.s32 %v484, %v486
    %v488 = vrot.slane %v481, %v487
    %v490 = vlaneseq
    %vm491 = vcmp.ge.s32.totalorder %v490, 0
    %vm492 = vcmp.lt.s32.totalorder %v490, 512
    %vm493 = vmand %vm491, %vm492
    %494 = vst.msk [vmem:[#allocation9] sm:$0xf] %vm493, %v488
    %v495 = vld [vmem:[%s3] sm:$0xff]
    %s496 = sld [smem:[#allocation8 + $0x1]]
    %v497 = vstv %s496
    %v502 = vrot.slane %v380, 1
    %v503 = vrot.slane %v382, 1
    %v504 = vrot.slane %v451, 1
    %v505 = vrot.slane %v453, 1
    %v511 = vcombine.high %v495, %v495
    %v513 = vunpack.c.l.s4 1983009808
    %v514 = vunpack.c.0.s8 %v513
    %v515 = vlaneseq
    %v516 = vshrl.u32 %v515, 7
    %v517 = vsub.s32 %v514, %v516
    %v518 = vrot.slane %v495, %v517
    %v520 = vunpack.c.l.s4 1983009808
    %v521 = vunpack.c.0.s8 %v520
    %v522 = vlaneseq
    %v523 = vshrl.u32 %v522, 7
    %v524 = vsub.s32 %v521, %v523
    %v525 = vrot.slane %v511, %v524
    %v526 = vcombine.high %v518, %v518
    %v527 = vcombine.high %v525, %v525
    %532 = vmatprep.subr.mxu0 %v526
    %533 = vmatpush1.xpose.msra.mxu0 %v518
    %534 = vmatprep.subr.mxu0 0.0
    %535 = vmatpush1.xpose.msra.mxu0 0.0
    %536 = vmatprep.subr.mxu0 0.0
    %537 = vmatpush1.xpose.msra.mxu0 0.0
    %538 = vmatprep.subr.mxu0 0.0
    %539 = vmatpush1.xpose.msra.mxu0 0.0
    %540 = vmatprep.subr.mxu0 0.0
    %541 = vmatpush1.xpose.msra.mxu0 0.0
    %542 = vmatprep.subr.mxu0 0.0
    %543 = vmatpush1.xpose.msra.mxu0 0.0
    %544 = vmatprep.subr.mxu0 0.0
    %545 = vmatpush1.xpose.msra.mxu0 0.0
    %546 = vmatprep.subr.mxu0 0.0
    %547 = vmatpush1.xpose.msra.mxu0 0.0
    %548 = vmatprep.subr.mxu0 0.0
    %549 = vmatpush1.xpose.msra.mxu0 0.0
    %550 = vmatprep.subr.mxu0 0.0
    %551 = vmatpush1.xpose.msra.mxu0 0.0
    %552 = vmatprep.subr.mxu0 0.0
    %553 = vmatpush1.xpose.msra.mxu0 0.0
    %554 = vmatprep.subr.mxu0 0.0
    %555 = vmatpush1.xpose.msra.mxu0 0.0
    %556 = vmatprep.subr.mxu0 0.0
    %557 = vmatpush1.xpose.msra.mxu0 0.0
    %558 = vmatprep.subr.mxu0 0.0
    %559 = vmatpush1.xpose.msra.mxu0 0.0
    %560 = vmatprep.subr.mxu0 0.0
    %561 = vmatpush1.xpose.msra.mxu0 0.0
    %562 = vmatprep.subr.mxu0 0.0
    %563 = vmatpush1.xpose.msra.mxu0 0.0
    %564 = vmatprep.subr.mxu0 0.0
    %565 = vmatpush1.xpose.msra.mxu0 0.0
    %566 = vmatprep.subr.mxu0 0.0
    %567 = vmatpush1.xpose.msra.mxu0 0.0
    %568 = vmatprep.subr.mxu0 0.0
    %569 = vmatpush1.xpose.msra.mxu0 0.0
    %570 = vmatprep.subr.mxu0 0.0
    %571 = vmatpush1.xpose.msra.mxu0 0.0
    %572 = vmatprep.subr.mxu0 0.0
    %573 = vmatpush1.xpose.msra.mxu0 0.0
    %574 = vmatprep.subr.mxu0 0.0
    %575 = vmatpush1.xpose.msra.mxu0 0.0
    %576 = vmatprep.subr.mxu0 0.0
    %577 = vmatpush1.xpose.msra.mxu0 0.0
    %578 = vmatprep.subr.mxu0 0.0
    %579 = vmatpush1.xpose.msra.mxu0 0.0
    %580 = vmatprep.subr.mxu0 0.0
    %581 = vmatpush1.xpose.msra.mxu0 0.0
    %582 = vmatprep.subr.mxu0 0.0
    %583 = vmatpush1.xpose.msra.mxu0 0.0
    %584 = vmatprep.subr.mxu0 0.0
    %585 = vmatpush1.xpose.msra.mxu0 0.0
    %586 = vmatprep.subr.mxu0 0.0
    %587 = vmatpush1.xpose.msra.mxu0 0.0
    %588 = vmatprep.subr.mxu0 0.0
    %589 = vmatpush1.xpose.msra.mxu0 0.0
    %590 = vmatprep.subr.mxu0 0.0
    %591 = vmatpush1.xpose.msra.mxu0 0.0
    %592 = vmatprep.subr.mxu0 0.0
    %593 = vmatpush1.xpose.msra.mxu0 0.0
    %594 = vmatprep.subr.mxu0 0.0
    %595 = vmatpush1.xpose.msra.mxu0 0.0
    %596 = vmatprep.mubr.f32.mxu0 %v503
    %597 = vmatmul.mubr.f32.gmra.mrb[0].mxu0 %v502
    %v598 = vpop.f32.mrb[0].mxu0
    %v599 = vadd.f32 %v497, %v598
    %v600 = vpop.f32.mrb[0].mxu0
    %601 = vdwg.mxu0
    %602 = vmatprep.subr.mxu0 %v527
    %603 = vmatpush1.xpose.msra.mxu0 %v525
    %604 = vmatprep.subr.mxu0 0.0
    %605 = vmatpush1.xpose.msra.mxu0 0.0
    %606 = vmatprep.subr.mxu0 0.0
    %607 = vmatpush1.xpose.msra.mxu0 0.0
    %608 = vmatprep.subr.mxu0 0.0
    %609 = vmatpush1.xpose.msra.mxu0 0.0
    %610 = vmatprep.subr.mxu0 0.0
    %611 = vmatpush1.xpose.msra.mxu0 0.0
    %612 = vmatprep.subr.mxu0 0.0
    %613 = vmatpush1.xpose.msra.mxu0 0.0
    %614 = vmatprep.subr.mxu0 0.0
    %615 = vmatpush1.xpose.msra.mxu0 0.0
    %616 = vmatprep.subr.mxu0 0.0
    %617 = vmatpush1.xpose.msra.mxu0 0.0
    %618 = vmatprep.subr.mxu0 0.0
    %619 = vmatpush1.xpose.msra.mxu0 0.0
    %620 = vmatprep.subr.mxu0 0.0
    %621 = vmatpush1.xpose.msra.mxu0 0.0
    %622 = vmatprep.subr.mxu0 0.0
    %623 = vmatpush1.xpose.msra.mxu0 0.0
    %624 = vmatprep.subr.mxu0 0.0
    %625 = vmatpush1.xpose.msra.mxu0 0.0
    %626 = vmatprep.subr.mxu0 0.0
    %627 = vmatpush1.xpose.msra.mxu0 0.0
    %628 = vmatprep.subr.mxu0 0.0
    %629 = vmatpush1.xpose.msra.mxu0 0.0
    %630 = vmatprep.subr.mxu0 0.0
    %631 = vmatpush1.xpose.msra.mxu0 0.0
    %632 = vmatprep.subr.mxu0 0.0
    %633 = vmatpush1.xpose.msra.mxu0 0.0
    %634 = vmatprep.subr.mxu0 0.0
    %635 = vmatpush1.xpose.msra.mxu0 0.0
    %636 = vmatprep.subr.mxu0 0.0
    %637 = vmatpush1.xpose.msra.mxu0 0.0
    %638 = vmatprep.subr.mxu0 0.0
    %639 = vmatpush1.xpose.msra.mxu0 0.0
    %640 = vmatprep.subr.mxu0 0.0
    %641 = vmatpush1.xpose.msra.mxu0 0.0
    %642 = vmatprep.subr.mxu0 0.0
    %643 = vmatpush1.xpose.msra.mxu0 0.0
    %644 = vmatprep.subr.mxu0 0.0
    %645 = vmatpush1.xpose.msra.mxu0 0.0
    %646 = vmatprep.subr.mxu0 0.0
    %647 = vmatpush1.xpose.msra.mxu0 0.0
    %648 = vmatprep.subr.mxu0 0.0
    %649 = vmatpush1.xpose.msra.mxu0 0.0
    %650 = vmatprep.subr.mxu0 0.0
    %651 = vmatpush1.xpose.msra.mxu0 0.0
    %652 = vmatprep.subr.mxu0 0.0
    %653 = vmatpush1.xpose.msra.mxu0 0.0
    %654 = vmatprep.subr.mxu0 0.0
    %655 = vmatpush1.xpose.msra.mxu0 0.0
    %656 = vmatprep.subr.mxu0 0.0
    %657 = vmatpush1.xpose.msra.mxu0 0.0
    %658 = vmatprep.subr.mxu0 0.0
    %659 = vmatpush1.xpose.msra.mxu0 0.0
    %660 = vmatprep.subr.mxu0 0.0
    %661 = vmatpush1.xpose.msra.mxu0 0.0
    %662 = vmatprep.subr.mxu0 0.0
    %663 = vmatpush1.xpose.msra.mxu0 0.0
    %664 = vmatprep.subr.mxu0 0.0
    %665 = vmatpush1.xpose.msra.mxu0 0.0
    %666 = vmatprep.mubr.f32.mxu0 %v505
    %667 = vmatmul.mubr.f32.gmra.mrb[0].mxu0 %v504
    %v668 = vpop.f32.mrb[0].mxu0
    %v669 = vadd.f32 %v599, %v668
    %v670 = vpop.f32.mrb[0].mxu0
    %671 = vdwg.mxu0
    %vm672 = vcmask 8192
    %673 = vst.msk [vmem:[#allocation10] sm:$0x1] %vm672, %v669
    // Predicated region
    $region34: #{tpu_custom_call.1} parent=1 // pred_check
      _
    $region35: #{tpu_custom_call.1} parent=1 // pred_check_branch
      %675 = sbr.rel (0) target = $region37
    $region36: #{tpu_custom_call.1} parent=1 // pred_region
      %s677 = ssub.s32 64, 64
      %678 = vsyncadd [#allocation4], %s677
      %s680 = sshll.u32 [#allocation9], 4
      %s681 = int_to_ptr.vmem [resolvable:$true] %s680
      %683 = dma.vmem_to_hbm [thread:$0]  %s681, 64, %s5, [#allocation4]
    $region37: #{tpu_custom_call.1} parent=1 // pred_fallthru
      _
    // Predicated region
    $region38: #{tpu_custom_call.1} parent=1 // pred_check
      _
    $region39: #{tpu_custom_call.1} parent=1 // pred_check_branch
      %685 = sbr.rel (0) target = $region41
    $region40: #{tpu_custom_call.1} parent=1 // pred_region
      %s687 = ssub.s32 16, 16
      %688 = vsyncadd [#allocation11], %s687
      %s690 = sshll.u32 [#allocation10], 4
      %s691 = int_to_ptr.vmem [resolvable:$true] %s690
      %693 = dma.vmem_to_hbm [thread:$0]  %s691, 16, %s6, [#allocation11]
    $region41: #{tpu_custom_call.1} parent=1 // pred_fallthru
      _
    // Predicated region
    $region42: #{tpu_custom_call.1} parent=1 // pred_check
      _
    $region43: #{tpu_custom_call.1} parent=1 // pred_check_branch
      %695 = sbr.rel (0) target = $region45
    $region44: #{tpu_custom_call.1} parent=1 // pred_region
      %696 = dma.done [#allocation4], 64
    $region45: #{tpu_custom_call.1} parent=1 // pred_fallthru
      _
    // Predicated region
    $region46: #{tpu_custom_call.1} parent=1 // pred_check
      _
    $region47: #{tpu_custom_call.1} parent=1 // pred_check_branch
      %698 = sbr.rel (0) target = $region49
    $region48: #{tpu_custom_call.1} parent=1 // pred_region
      %699 = dma.done [#allocation11], 16
    $region49: #{tpu_custom_call.1} parent=1 // pred_fallthru
      _
    %700 = vsyncpa [#allocation3], 1
    %701 = vsyncpa [#allocation7], 1
    %702 = vsyncpa [#allocation4], 1
    %703 = vsyncpa [#allocation11], 1
    %704 = vsyncpa [#allocation5], 1

</llo_original>
